<compile_context>
chip_gen: v5e
topology: v5e:2x2
jax: 0.10.0
libtpu: 0.0.40
codegen_flags: <defaults>
</compile_context>

<pallas_src>
import math
import functools

import jax
import jax.numpy as jnp
from jax.experimental import pallas as pl
from jax.experimental.pallas import tpu as pltpu


def _round_up(x, m):
    return (x + m - 1) // m * m


def _cdiv(a, b):
    return (a + b - 1) // b


def _choose_tile(dim, cap, align):
    """Largest aligned tile <= cap that minimizes padding of `dim`."""
    dim_a = _round_up(dim, align)
    if dim_a <= cap:
        return dim_a
    nblocks = _cdiv(dim, cap)
    return _round_up(_cdiv(dim, nblocks), align)


def _vmem_limit_bytes():
    # Generation-aware scoped-VMEM budget (v5e/v6e: 128 MiB, v7x: 64 MiB phys).
    cap = 64 * 1024 * 1024
    try:
        info = pltpu.get_tpu_info()
        cap = int(getattr(info, "vmem_capacity_bytes", cap))
    except Exception:
        pass
    return max(32 * 1024 * 1024, (cap * 3) // 4)


# ----------------------------- kernels -------------------------------------


def _el_kernel_single_k(x_ref, w_ref, b_ref, o_ref, *, scale):
    # Whole K fits in one tile: no scratch, no predicated regions.
    acc = jnp.dot(x_ref[...], w_ref[...], preferred_element_type=jnp.float32)
    o_ref[...] = (acc * scale + b_ref[...]).astype(o_ref.dtype)


def _el_kernel_multi_k(x_ref, w_ref, b_ref, o_ref, acc_ref, *, scale):
    # x_ref: (tm, tk), w_ref: (tk, tn), b_ref: (1, tn), o_ref: (tm, tn)
    k = pl.program_id(2)

    @pl.when(k == 0)
    def _():
        acc_ref[...] = jnp.zeros_like(acc_ref)

    acc_ref[...] += jnp.dot(
        x_ref[...], w_ref[...], preferred_element_type=jnp.float32
    )

    @pl.when(k == pl.num_programs(2) - 1)
    def _():
        # Equalized-lr scalar applied once to the f32 accumulator; bias already
        # carries lr_mul (folded during parameter prep).
        o_ref[...] = (acc_ref[...] * scale + b_ref[...]).astype(o_ref.dtype)


# --------------------------- parameter prep --------------------------------


def prepare_equal_linear_params(weight, bias=None, *, lr_mul=1.0,
                                compute_dtype=jnp.bfloat16,
                                tn_max=512, tk_max=1024):
    """One-time weight/bias layout prep (hoist out of the per-call hot path).

    weight: (out_dim, in_dim), bias: (out_dim,) or None.
    Returns a dict of ready-to-use padded (K, N) bf16 weight, f32 bias*lr_mul,
    the equalized-lr scale and the chosen tn/tk tiles.
    """
    out_dim, in_dim = weight.shape
    scale = 1.0 / math.sqrt(in_dim) * lr_mul

    tn = _choose_tile(out_dim, tn_max, 128)
    tk = _choose_tile(in_dim, tk_max, 128)
    N = _round_up(out_dim, tn)
    K = _round_up(in_dim, tk)

    # Transpose once to (K, N) so the kernel never transposes in VMEM; cast to
    # the MXU compute dtype (bf16) once.
    w_t = weight.T.astype(compute_dtype)
    if (K, N) != (in_dim, out_dim):
        w_t = jnp.pad(w_t, ((0, K - in_dim), (0, N - out_dim)))

    if bias is None:
        bias = jnp.zeros((out_dim,), dtype=jnp.float32)
    b_eff = (bias.astype(jnp.float32) * lr_mul).reshape(1, out_dim)
    if N != out_dim:
        b_eff = jnp.pad(b_eff, ((0, 0), (0, N - out_dim)))

    return dict(w=w_t, b=b_eff, scale=scale, in_dim=in_dim, out_dim=out_dim,
                tn=tn, tk=tk, compute_dtype=compute_dtype)


# ------------------------------ forward ------------------------------------


def equal_linear_prepared(x, params, *, tm_max=512, out_dtype=None):
    """EqualLinear forward using pre-laid-out parameters. x: (B, in_dim)."""
    B, in_dim = x.shape
    assert in_dim == params["in_dim"]
    out_dim = params["out_dim"]
    tn, tk = params["tn"], params["tk"]
    w_p, b_p, scale = params["w"], params["b"], params["scale"]
    compute_dtype = params["compute_dtype"]
    K, N = w_p.shape
    out_dtype = out_dtype if out_dtype is not None else x.dtype

    # Batch tile: 8-aligned, padding-waste-aware.
    tm = _choose_tile(B, tm_max, 8)
    # Ensure >=2 "parallel" tiles so both v7x TensorCores get work on small
    # layers (one extra grid step is noise on single-core v5e/v6e).
    if _cdiv(B, tm) * (N // tn) == 1 and B >= 16:
        tm = _round_up(_cdiv(B, 2), 8)
    M = _round_up(B, tm)

    x_p = x.astype(compute_dtype)
    if (M, K) != (B, in_dim):
        x_p = jnp.pad(x_p, ((0, M - B), (0, K - in_dim)))

    kt = K // tk
    in_bytes = jnp.dtype(compute_dtype).itemsize
    out_bytes = jnp.dtype(out_dtype).itemsize
    cost = pl.CostEstimate(
        flops=2 * M * N * K,
        bytes_accessed=(M * K + K * N) * in_bytes + M * N * out_bytes + N * 4,
        transcendentals=0,
    )

    if kt == 1:
        kernel = functools.partial(_el_kernel_single_k, scale=scale)
        grid = (M // tm, N // tn)
        in_specs = [
            pl.BlockSpec((tm, tk), lambda i, j: (i, 0)),
            pl.BlockSpec((tk, tn), lambda i, j: (0, j)),
            pl.BlockSpec((1, tn), lambda i, j: (0, j)),
        ]
        out_specs = pl.BlockSpec((tm, tn), lambda i, j: (i, j))
        scratch = []
        dims = ("parallel", "parallel")
    else:
        kernel = functools.partial(_el_kernel_multi_k, scale=scale)
        grid = (M // tm, N // tn, kt)
        in_specs = [
            pl.BlockSpec((tm, tk), lambda i, j, k: (i, k)),
            pl.BlockSpec((tk, tn), lambda i, j, k: (k, j)),
            pl.BlockSpec((1, tn), lambda i, j, k: (0, j)),
        ]
        out_specs = pl.BlockSpec((tm, tn), lambda i, j, k: (i, j))
        scratch = [pltpu.VMEM((tm, tn), jnp.float32)]
        dims = ("parallel", "parallel", "arbitrary")

    out = pl.pallas_call(
        kernel,
        out_shape=jax.ShapeDtypeStruct((M, N), out_dtype),
        grid_spec=pltpu.PrefetchScalarGridSpec(
            num_scalar_prefetch=0,
            grid=grid,
            in_specs=in_specs,
            out_specs=out_specs,
            scratch_shapes=scratch,
        ),
        compiler_params=pltpu.CompilerParams(
            dimension_semantics=dims,
            vmem_limit_bytes=_vmem_limit_bytes(),
        ),
        cost_estimate=cost,
    )(x_p, w_p, b_p)

    if (M, N) != (B, out_dim):
        out = out[:B, :out_dim]
    return out
    # TODO(synk): for the StyleSDF mapping network, fuse the whole stack of
    # EqualLinear(+fused_leaky_relu) layers into one kernel with the (tiny,
    # ~1 MiB bf16) weight stack resident in VMEM and a grid only over batch
    # tiles — removes per-layer launch and per-layer HBM weight DMAs.


def equal_linear(x, weight, bias=None, *, lr_mul=1.0,
                 compute_dtype=jnp.bfloat16,
                 tm_max=512, tn_max=512, tk_max=1024, out_dtype=None):
    """Convenience wrapper: prep + forward (prep constant-folds under jit when
    weights are parameters)."""
    params = prepare_equal_linear_params(
        weight, bias, lr_mul=lr_mul, compute_dtype=compute_dtype,
        tn_max=tn_max, tk_max=tk_max)
    return equal_linear_prepared(x, params, tm_max=tm_max, out_dtype=out_dtype)


# ------------------------------- demo --------------------------------------


def _ref_equal_linear(x, weight, bias, lr_mul):
    scale = 1.0 / math.sqrt(x.shape[1]) * lr_mul
    return x @ (weight * scale).T + bias * lr_mul


if __name__ == "__main__":
    key = jax.random.PRNGKey(0)

    # bf16 operands / f32 accumulation -> loosened tolerances vs f32 reference.
    ATOL, RTOL = 5e-2, 5e-2

    # --- 1) Small mapping-network-style layer (single tile, single-K path) ---
    batch, in_dim, out_dim, lr_mul = 8, 32, 64, 1.0
    k_x, k_w, key = jax.random.split(key, 3)
    weight = jax.random.normal(k_w, (out_dim, in_dim), dtype=jnp.float32) / lr_mul
    bias = jnp.zeros((out_dim,), dtype=jnp.float32)
    x = jax.random.normal(k_x, (batch, in_dim), dtype=jnp.float32)

    out = jax.block_until_ready(equal_linear(x, weight, bias, lr_mul=lr_mul))
    ref = _ref_equal_linear(x, weight, bias, lr_mul)
    assert out.shape == (batch, out_dim) and out.dtype == x.dtype
    assert jnp.allclose(out, ref, atol=ATOL, rtol=RTOL)

    # --- 2) Awkward batch, hoisted-prep path (multi M tile, minimal padding) --
    b2, in2, out2, lr2 = 300, 640, 384, 0.5
    k_x2, k_w2, key = jax.random.split(key, 3)
    w2 = jax.random.normal(k_w2, (out2, in2), dtype=jnp.float32) / lr2
    bvec2 = jnp.full((out2,), 0.1, dtype=jnp.float32)
    x2 = jax.random.normal(k_x2, (b2, in2), dtype=jnp.float32)

    params2 = prepare_equal_linear_params(w2, bvec2, lr_mul=lr2)
    out2_arr = jax.block_until_ready(equal_linear_prepared(x2, params2))
    ref2 = _ref_equal_linear(x2, w2, bvec2, lr2)
    assert out2_arr.shape == (b2, out2)
    assert jnp.allclose(out2_arr, ref2, atol=ATOL, rtol=RTOL)

    # --- 3) Force the multi-K accumulation path with a small tk cap ----------
    b3, in3, out3, lr3 = 64, 512, 256, 1.0
    k_x3, k_w3, key = jax.random.split(key, 3)
    w3 = jax.random.normal(k_w3, (out3, in3), dtype=jnp.float32) / lr3
    bvec3 = jnp.full((out3,), -0.2, dtype=jnp.float32)
    x3 = jax.random.normal(k_x3, (b3, in3), dtype=jnp.float32)

    out3_arr = jax.block_until_ready(
        equal_linear(x3, w3, bvec3, lr_mul=lr3, tk_max=256))
    ref3 = _ref_equal_linear(x3, w3, bvec3, lr3)
    assert out3_arr.shape == (b3, out3)
    assert jnp.allclose(out3_arr, ref3, atol=ATOL, rtol=RTOL)

    print("KERNEL_OK")
</pallas_src>

<mosaic_0001>
module attributes {stable_mosaic.version = 11 : i64} {
  func.func @_el_kernel_single_k(%arg0: i32, %arg1: i32, %arg2: memref<8x128xbf16, #tpu.memory_space<vmem>>, %arg3: memref<128x128xbf16, #tpu.memory_space<vmem>>, %arg4: memref<1x128xf32, #tpu.memory_space<vmem>>, %arg5: memref<8x128xf32, #tpu.memory_space<vmem>>) attributes {dimension_semantics = [#tpu.dimension_semantics<parallel>, #tpu.dimension_semantics<parallel>], iteration_bounds = array<i64: 1, 1>, scalar_prefetch = 0 : i64, scratch_operands = 0 : i64, tpu.core_type = #tpu.core_type<tc>, window_params = [{transform_indices = @transform_0, window_bounds = array<i64: 8, 128>}, {transform_indices = @transform_1, window_bounds = array<i64: 128, 128>}, {transform_indices = @transform_2, window_bounds = array<i64: 1, 128>}, {transform_indices = @transform_3, window_bounds = array<i64: 8, 128>}]} {
    %c0 = arith.constant 0 : index
    %c0_0 = arith.constant 0 : index
    %0 = vector.load %arg2[%c0, %c0_0] : memref<8x128xbf16, #tpu.memory_space<vmem>>, vector<8x128xbf16>
    %c0_1 = arith.constant 0 : index
    %c0_2 = arith.constant 0 : index
    %1 = vector.load %arg3[%c0_1, %c0_2] : memref<128x128xbf16, #tpu.memory_space<vmem>>, vector<128x128xbf16>
    %cst = arith.constant dense<0.000000e+00> : vector<8x128xf32>
    %2 = tpu.matmul %0, %1, %cst {dimension_numbers = #tpu.dot_dimension_numbers<[1], [0], [0], [1], [0, 0, 1, 1], [], []>} : vector<8x128xbf16>, vector<128x128xbf16>, vector<8x128xf32> -> vector<8x128xf32>
    %cst_3 = arith.constant 0.176776692 : f32
    %3 = vector.broadcast %cst_3 : f32 to vector<8x128xf32>
    %4 = arith.mulf %2, %3 : vector<8x128xf32>
    %c0_4 = arith.constant 0 : index
    %c0_5 = arith.constant 0 : index
    %5 = vector.load %arg4[%c0_4, %c0_5] : memref<1x128xf32, #tpu.memory_space<vmem>>, vector<1x128xf32>
    %6 = vector.broadcast %5 : vector<1x128xf32> to vector<8x128xf32>
    %7 = arith.addf %4, %6 : vector<8x128xf32>
    %c0_6 = arith.constant 0 : index
    %c0_7 = arith.constant 0 : index
    %8 = vector.load %arg5[%c0_6, %c0_7] : memref<8x128xf32, #tpu.memory_space<vmem>>, vector<8x128xf32>
    tpu.vector_store %arg5[%c0_6, %c0_7], %7 {strides = array<i32>} : memref<8x128xf32, #tpu.memory_space<vmem>>, vector<8x128xf32>,
    return
  }
  func.func @transform_0(%arg0: i32, %arg1: i32) -> (i32, i32) {
    %c0_i32 = arith.constant 0 : i32
    %c0_i32_0 = arith.constant 0 : i32
    return %arg0, %c0_i32 : i32, i32
  }
  func.func @transform_1(%arg0: i32, %arg1: i32) -> (i32, i32) {
    %c0_i32 = arith.constant 0 : i32
    %c0_i32_0 = arith.constant 0 : i32
    return %c0_i32, %arg1 : i32, i32
  }
  func.func @transform_2(%arg0: i32, %arg1: i32) -> (i32, i32) {
    %c0_i32 = arith.constant 0 : i32
    %c0_i32_0 = arith.constant 0 : i32
    return %c0_i32, %arg1 : i32, i32
  }
  func.func @transform_3(%arg0: i32, %arg1: i32) -> (i32, i32) {
    %c0_i32 = arith.constant 0 : i32
    return %arg0, %arg1 : i32, i32
  }
}

</mosaic_0001>

<llo_original>
// kernel: tpu_custom_call.1
$region0: #{tpu_custom_call.1}
  #allocation0 [shape = 'u32[]', space=smem, size = 0x4, offset = 0x4, fixed_abs, tag = 'smem constant byte address 0x4 - core index']
  #allocation1 [shape = 'u32[72,128]{1,0:T(1,128)}', space=vmem, size = 0x9000, scoped, tag = 'internal scratch']
  %s0 = inlined_call_operand.hbm [shape: bf16[8,128], index: 0, kind: input, shape index: {}]
  %s1 = inlined_call_operand.hbm [shape: bf16[128,128], index: 1, kind: input, shape index: {}]
  %s2 = inlined_call_operand.vmem [shape: f32[1,128], index: 2, kind: input, shape index: {}]
  %s3 = inlined_call_operand.hbm [shape: f32[8,128], index: 3, kind: output, shape index: {}]
  %s4 = sld [smem:[#allocation0]]
  $region30: #{tpu_custom_call.1} parent=0
    _
  %s6 = ssub.s32 1, %s4
  %s7 = scalar_select 0, %s6, %s4
  $region1: #{tpu_custom_call.1} parent=0
    #allocation2 [shape = 'u8[2048]{0}', space=vmem, size = 0x800, scoped, tag = 'input window, operand 0, single buffered']
    #allocation3 [shape = 's32[1]{0}', space=sflag, size = 0x4, scoped, tag = 'scoped memory for tpu_custom_call.1']
    #allocation4 [shape = 's32[1]{0}', space=sflag, size = 0x4, scoped, tag = 'scoped memory for tpu_custom_call.1']
    #allocation5 [shape = 'u8[32768]{0}', space=vmem, size = 0x8000, scoped, tag = 'input window, operand 1, single buffered']
    #allocation6 [shape = 's32[1]{0}', space=sflag, size = 0x4, scoped, tag = 'scoped memory for tpu_custom_call.1']
    #allocation7 [shape = 'u8[4096]{0}', space=vmem, size = 0x1000, scoped, tag = 'output window, operand 0, single buffered']
    %8 = vsyncpa [#allocation3], 0
    %9 = vsyncpa [#allocation6], 0
    %10 = vsyncpa [#allocation4], 0
    // Predicated region
    $region2: #{tpu_custom_call.1} parent=1 // pred_check
      _
    $region3: #{tpu_custom_call.1} parent=1 // pred_check_branch
      %12 = sbr.rel (0) target = $region5
    $region4: #{tpu_custom_call.1} parent=1 // pred_region
      %14 = vsyncadd [#allocation3], 0
      %s16 = sshll.u32 %s0, 4
      %s17 = int_to_ptr.hbm [resolvable:$true] %s16
      %s18 = sshll.u32 [#allocation2], 4
      %s19 = int_to_ptr.vmem [resolvable:$true] %s18
      %21 = dma.hbm_to_vmem [thread:$0]  %s17, 64, %s19, [#allocation3]
    $region5: #{tpu_custom_call.1} parent=1 // pred_fallthru
      _
    // Predicated region
    $region6: #{tpu_custom_call.1} parent=1 // pred_check
      _
    $region7: #{tpu_custom_call.1} parent=1 // pred_check_branch
      %23 = sbr.rel (0) target = $region9
    $region8: #{tpu_custom_call.1} parent=1 // pred_region
      %25 = vsyncadd [#allocation6], 0
      %s26 = sshll.u32 %s1, 4
      %s27 = int_to_ptr.hbm [resolvable:$true] %s26
      %s28 = sshll.u32 [#allocation5], 4
      %s29 = int_to_ptr.vmem [resolvable:$true] %s28
      %34 = dma.hbm_to_vmem [thread:$0]  %s27, 1024, %s29, [#allocation6], 64, 64, 4
    $region9: #{tpu_custom_call.1} parent=1 // pred_fallthru
      _
    // Predicated region
    $region10: #{tpu_custom_call.1} parent=1 // pred_check
      _
    $region11: #{tpu_custom_call.1} parent=1 // pred_check_branch
      %36 = sbr.rel (0) target = $region13
    $region12: #{tpu_custom_call.1} parent=1 // pred_region
      _
    $region13: #{tpu_custom_call.1} parent=1 // pred_fallthru
      _
    // Predicated region
    $region14: #{tpu_custom_call.1} parent=1 // pred_check
      _
    $region15: #{tpu_custom_call.1} parent=1 // pred_check_branch
      %38 = sbr.rel (0) target = $region17
    $region16: #{tpu_custom_call.1} parent=1 // pred_region
      %40 = dma.done [#allocation3], 64
    $region17: #{tpu_custom_call.1} parent=1 // pred_fallthru
      _
    // Predicated region
    $region18: #{tpu_custom_call.1} parent=1 // pred_check
      _
    $region19: #{tpu_custom_call.1} parent=1 // pred_check_branch
      %42 = sbr.rel (0) target = $region21
    $region20: #{tpu_custom_call.1} parent=1 // pred_region
      %44 = dma.done [#allocation6], 1024
    $region21: #{tpu_custom_call.1} parent=1 // pred_fallthru
      _
    %v45 = vld [vmem:[#allocation2] sm:$0xf]
    %v46 = vld [vmem:[#allocation5] sm:$0xf]
    %v47 = vld [vmem:[#allocation5 + $0x4] sm:$0xf]
    %v48 = vld [vmem:[#allocation5 + $0x8] sm:$0xf]
    %v49 = vld [vmem:[#allocation5 + $0xc] sm:$0xf]
    %v50 = vld [vmem:[#allocation5 + $0x10] sm:$0xf]
    %v51 = vld [vmem:[#allocation5 + $0x14] sm:$0xf]
    %v52 = vld [vmem:[#allocation5 + $0x18] sm:$0xf]
    %v53 = vld [vmem:[#allocation5 + $0x1c] sm:$0xf]
    %v54 = vld [vmem:[#allocation5 + $0x20] sm:$0xf]
    %v55 = vld [vmem:[#allocation5 + $0x24] sm:$0xf]
    %v56 = vld [vmem:[#allocation5 + $0x28] sm:$0xf]
    %v57 = vld [vmem:[#allocation5 + $0x2c] sm:$0xf]
    %v58 = vld [vmem:[#allocation5 + $0x30] sm:$0xf]
    %v59 = vld [vmem:[#allocation5 + $0x34] sm:$0xf]
    %v60 = vld [vmem:[#allocation5 + $0x38] sm:$0xf]
    %v61 = vld [vmem:[#allocation5 + $0x3c] sm:$0xf]
    %v78 = vunpack.c.l.b16 %v46
    %v79 = vunpack.c.l.b16 %v47
    %v80 = vunpack.c.l.b16 %v48
    %v81 = vunpack.c.l.b16 %v49
    %v82 = vunpack.c.l.b16 %v50
    %v83 = vunpack.c.l.b16 %v51
    %v84 = vunpack.c.l.b16 %v52
    %v85 = vunpack.c.l.b16 %v53
    %v86 = vunpack.c.l.b16 %v54
    %v87 = vunpack.c.l.b16 %v55
    %v88 = vunpack.c.l.b16 %v56
    %v89 = vunpack.c.l.b16 %v57
    %v90 = vunpack.c.l.b16 %v58
    %v91 = vunpack.c.l.b16 %v59
    %v92 = vunpack.c.l.b16 %v60
    %v93 = vunpack.c.l.b16 %v61
    %v94 = vpack.c.b16 %v79, %v78
    %v95 = vpack.c.b16 %v81, %v80
    %v96 = vpack.c.b16 %v83, %v82
    %v97 = vpack.c.b16 %v85, %v84
    %v98 = vpack.c.b16 %v87, %v86
    %v99 = vpack.c.b16 %v89, %v88
    %v100 = vpack.c.b16 %v91, %v90
    %v101 = vpack.c.b16 %v93, %v92
    %110 = vmatpush.bf16.msra.mxu0 %v101
    %111 = vmatpush.bf16.msra.mxu0 %v100
    %112 = vmatpush.bf16.msra.mxu0 %v99
    %113 = vmatpush.bf16.msra.mxu0 %v98
    %114 = vmatpush.bf16.msra.mxu0 %v97
    %115 = vmatpush.bf16.msra.mxu0 %v96
    %116 = vmatpush.bf16.msra.mxu0 %v95
    %117 = vmatpush.bf16.msra.mxu0 %v94
    %118 = vmatmul.bf16.gmra.mxu0 %v45
    %v119 = vpop.f32.mrf.mxu0
    %v120 = vadd.f32 0.0, %v119
    %v121 = vpop.f32.mrf.mxu0
    %122 = vdwg.mxu0
    %v123 = vmul.f32 %v120, 0.17677669
    %v124 = vld [vmem:[%s2] sm:$0x1]
    %v126 = vperm.slane %v124, 0
    %v128 = vadd.f32 %v123, %v126
    %129 = vst [vmem:[#allocation7] sm:$0xff] %v128
    // Predicated region
    $region22: #{tpu_custom_call.1} parent=1 // pred_check
      _
    $region23: #{tpu_custom_call.1} parent=1 // pred_check_branch
      %131 = sbr.rel (0) target = $region25
    $region24: #{tpu_custom_call.1} parent=1 // pred_region
      %133 = vsyncadd [#allocation4], 0
      %s135 = sshll.u32 [#allocation7], 4
      %s136 = int_to_ptr.vmem [resolvable:$true] %s135
      %s137 = sshll.u32 %s3, 4
      %s138 = int_to_ptr.hbm [resolvable:$true] %s137
      %140 = dma.vmem_to_hbm [thread:$0]  %s136, 128, %s138, [#allocation4]
    $region25: #{tpu_custom_call.1} parent=1 // pred_fallthru
      _
    // Predicated region
    $region26: #{tpu_custom_call.1} parent=1 // pred_check
      _
    $region27: #{tpu_custom_call.1} parent=1 // pred_check_branch
      %142 = sbr.rel (0) target = $region29
    $region28: #{tpu_custom_call.1} parent=1 // pred_region
      %144 = dma.done [#allocation4], 128
    $region29: #{tpu_custom_call.1} parent=1 // pred_fallthru
      _
    %145 = vsyncpa [#allocation3], 1
    %146 = vsyncpa [#allocation6], 1
    %147 = vsyncpa [#allocation4], 1

</llo_original>
